<compile_context>
chip_gen: v7x
topology: tpu7x:2x2x1
jax: 0.10.0
libtpu: 0.0.40
codegen_flags: <defaults>
</compile_context>

<pallas_src>
import functools

import jax
import jax.numpy as jnp
from jax import lax
from jax.experimental import pallas as pl
from jax.experimental.pallas import tpu as pltpu

EPS = 1e-5
HALO_ROWS = 16          # halo edge-block rows (multiple of 16: ok for f32 & bf16)


def _round_up(x, m):
    return ((x + m - 1) // m) * m


def _conv_stats_kernel(*refs, pre_act, valid_len):
    """One (n, l) tile: [optional scale/shift + ReLU] -> 3-tap conv -> stats.

    refs (pre_act=False): prev, cur, nxt, w, y_out, stats_out
    refs (pre_act=True):  prev, cur, nxt, w, scale_shift, y_out, stats_out
    """
    if pre_act:
        prev_ref, cur_ref, nxt_ref, w_ref, ss_ref, y_ref, st_ref = refs
    else:
        prev_ref, cur_ref, nxt_ref, w_ref, y_ref, st_ref = refs
        ss_ref = None

    l = pl.program_id(1)
    tl = cur_ref.shape[1]
    l0 = l * tl

    # Window covering original rows [l0-1, l0+tl+1): last row of the previous
    # tile's 16-row edge block, the tile itself, first row of the next tile's
    # edge block.
    prev_row = prev_ref[0, HALO_ROWS - 1:HALO_ROWS, :]
    nxt_row = nxt_ref[0, 0:1, :]
    window = jnp.concatenate([prev_row, cur_ref[0], nxt_row], axis=0)

    if pre_act:  # folded BatchNorm (scale/shift) + ReLU, f32 math
        wf = window.astype(jnp.float32)
        wf = jnp.maximum(wf * ss_ref[0:1, :] + ss_ref[1:2, :], 0.0)
        wmm = wf.astype(w_ref.dtype)
    else:        # pass 1: no BN yet, keep the activation dtype (no casts)
        wmm = window

    # Zero every row outside [0, valid_len): conv zero-padding + L padding.
    row = l0 - 1 + lax.broadcasted_iota(jnp.int32, (tl + 2, 1), 0)
    wmm = jnp.where((row >= 0) & (row < valid_len), wmm, jnp.zeros_like(wmm))

    # Three accumulating MXU dots (K = C each) instead of a 3C-wide im2col.
    acc = jnp.dot(wmm[0:tl, :], w_ref[0], preferred_element_type=jnp.float32)
    acc = acc + jnp.dot(wmm[1:tl + 1, :], w_ref[1],
                        preferred_element_type=jnp.float32)
    acc = acc + jnp.dot(wmm[2:tl + 2, :], w_ref[2],
                        preferred_element_type=jnp.float32)

    # Keep padded output rows exactly zero (and out of the BN statistics).
    out_row = l0 + lax.broadcasted_iota(jnp.int32, (tl, 1), 0)
    acc = jnp.where(out_row < valid_len, acc, 0.0)

    y_ref[0] = acc.astype(y_ref.dtype)

    # Per-sample sum / sum-of-squares, accumulated across the L grid axis.
    # Sublane-preserving (8, C) partial sums: aligned, unmasked stores, no
    # in-kernel cross-sublane reduction (final 8-row reduce done in fold_bn).
    @pl.when(l == 0)
    def _():
        st_ref[...] = jnp.zeros_like(st_ref)

    part = acc.reshape(tl // 8, 8, acc.shape[-1])
    st_ref[0, 0] = st_ref[0, 0] + jnp.sum(part, axis=0)
    st_ref[0, 1] = st_ref[0, 1] + jnp.sum(part * part, axis=0)


def _finalize_kernel(y_ref, x_ref, ss_ref, o_ref):
    """out = relu(y * scale + shift + identity)   (BN2 folded to scale/shift)."""
    y = y_ref[0].astype(jnp.float32)
    ident = x_ref[0].astype(jnp.float32)
    out = jnp.maximum(y * ss_ref[0:1, :] + ss_ref[1:2, :] + ident, 0.0)
    o_ref[0] = out.astype(o_ref.dtype)


def basic_block_1d_nlc(x_nlc, w1, g1, b1, w2, g2, b2, *,
                       act_dtype=jnp.float32, l_tile=None):
    """Channel-last core.  x_nlc: (N, L, C); conv weights PyTorch (Cout, Cin, 3)."""
    N, L, C = x_nlc.shape
    c_pad = _round_up(C, 128)                       # lane-dense last dim
    if l_tile is None:
        # ~512 KB activation tiles amortize per-grid-step overhead while
        # staying far below the VMEM limit (double-buffered in/out + weights).
        cap = max(128, (512 * 1024) // (c_pad * 4))
        cap = max(HALO_ROWS, (cap // HALO_ROWS) * HALO_ROWS)
        l_tile = min(_round_up(L, HALO_ROWS), cap)
    tl = _round_up(l_tile, HALO_ROWS)
    l_t = _round_up(L, tl)
    n_lt = l_t // tl

    # Padded activations: region outside [0,L) x [0,C) must be exact zeros.
    xp = jnp.zeros((N, l_t, c_pad), act_dtype)
    xp = xp.at[:, :L, :C].set(x_nlc.astype(act_dtype))

    def repack_w(w):                  # (Cout, Cin, 3) -> (3, Cin_pad, Cout_pad)
        wt = jnp.transpose(w, (2, 1, 0)).astype(act_dtype)
        return jnp.pad(wt, ((0, 0), (0, c_pad - C), (0, c_pad - C)))

    w1m, w2m = repack_w(w1), repack_w(w2)

    def pad_c(v):
        return jnp.pad(v.astype(jnp.float32), (0, c_pad - C))

    g1p, b1p, g2p, b2p = pad_c(g1), pad_c(b1), pad_c(g2), pad_c(b2)

    # ---- BlockSpecs ------------------------------------------------------
    cur_spec = pl.BlockSpec((1, tl, c_pad), lambda n, l: (n, l, 0))
    prev_spec = pl.BlockSpec(            # 16-row edge block ending at l0-1
        (1, HALO_ROWS, c_pad),
        lambda n, l: (n, jnp.maximum(l * (tl // HALO_ROWS) - 1, 0), 0))
    next_spec = pl.BlockSpec(            # 16-row edge block starting at l0+tl
        (1, HALO_ROWS, c_pad),
        lambda n, l: (n, jnp.minimum((l + 1) * (tl // HALO_ROWS),
                                     l_t // HALO_ROWS - 1), 0))
    w_spec = pl.BlockSpec((3, c_pad, c_pad), lambda n, l: (0, 0, 0))      # resident
    ss_spec = pl.BlockSpec((8, c_pad), lambda n, l: (0, 0))               # resident
    st_spec = pl.BlockSpec((1, 2, 8, c_pad), lambda n, l: (n, 0, 0, 0))   # per-n acc

    conv_params = pltpu.CompilerParams(
        dimension_semantics=("parallel", "arbitrary"))

    def conv_pass(inp, w, ss=None):
        pre_act = ss is not None
        in_specs = [prev_spec, cur_spec, next_spec, w_spec]
        args = [inp, inp, inp, w]
        if pre_act:
            in_specs.append(ss_spec)
            args.append(ss)
        return pl.pallas_call(
            functools.partial(_conv_stats_kernel, pre_act=pre_act, valid_len=L),
            grid=(N, n_lt),
            in_specs=in_specs,
            out_specs=[cur_spec, st_spec],
            out_shape=[jax.ShapeDtypeStruct((N, l_t, c_pad), act_dtype),
                       jax.ShapeDtypeStruct((N, 2, 8, c_pad), jnp.float32)],
            compiler_params=conv_params,
        )(*args)

    def fold_bn(stats, gamma_p, beta_p):
        s = jnp.sum(stats, axis=(0, 2))             # (2, C_pad): sum, sumsq
        cnt = float(N * L)
        mean = s[0] / cnt
        var = jnp.maximum(s[1] / cnt - mean * mean, 0.0)   # biased (PyTorch training)
        scale = gamma_p * lax.rsqrt(var + EPS)
        shift = beta_p - mean * scale
        return jnp.zeros((8, c_pad), jnp.float32).at[0].set(scale).at[1].set(shift)

    # Pass 1: conv1 + stats.  Pass 2: folded BN1+ReLU + conv2 + stats.
    y1, st1 = conv_pass(xp, w1m)
    ss1 = fold_bn(st1, g1p, b1p)
    y2, st2 = conv_pass(y1, w2m, ss1)
    ss2 = fold_bn(st2, g2p, b2p)

    # Pass 3: folded BN2 + residual add + ReLU.
    out = pl.pallas_call(
        _finalize_kernel,
        grid=(N, n_lt),
        in_specs=[cur_spec, cur_spec, ss_spec],
        out_specs=cur_spec,
        out_shape=jax.ShapeDtypeStruct((N, l_t, c_pad), jnp.float32),
        compiler_params=pltpu.CompilerParams(
            dimension_semantics=("parallel", "parallel")),
    )(y2, xp, ss2)

    return out[:, :L, :C]


def basic_block_1d(x_ncl, w1, g1, b1, w2, g2, b2, **kw):
    """PyTorch-layout entry point: x_ncl (N, C, L) -> (N, C, L)."""
    # TODO(synk): in a full model, keep activations NLC end-to-end; these two
    # transposes exist only to preserve the PyTorch NCL interface.
    x_nlc = jnp.transpose(x_ncl, (0, 2, 1))
    out = basic_block_1d_nlc(x_nlc, w1, g1, b1, w2, g2, b2, **kw)
    return jnp.transpose(out, (0, 2, 1))


def reference_block(x_ncl, w1, g1, b1, w2, g2, b2):
    """Plain-JAX reference mirroring PyTorch (NCL conv, training-mode BN)."""
    def conv(x, w):
        return lax.conv_general_dilated(
            x, w, window_strides=(1,), padding=((1, 1),),
            dimension_numbers=("NCH", "OIH", "NCH"))

    def bn(x, g, b):
        mean = x.mean(axis=(0, 2), keepdims=True)
        var = ((x - mean) ** 2).mean(axis=(0, 2), keepdims=True)
        return (g[None, :, None] * (x - mean) / jnp.sqrt(var + EPS)
                + b[None, :, None])

    out = jax.nn.relu(bn(conv(x_ncl, w1), g1, b1))
    out = bn(conv(out, w2), g2, b2)
    return jax.nn.relu(out + x_ncl)


if __name__ == "__main__":
    key = jax.random.PRNGKey(0)

    def make_inputs(n, c, l):
        ks = jax.random.split(key, 7)
        x = jax.random.normal(ks[0], (n, c, l), jnp.float32)
        w1 = 0.1 * jax.random.normal(ks[1], (c, c, 3), jnp.float32)
        w2 = 0.1 * jax.random.normal(ks[2], (c, c, 3), jnp.float32)
        g1 = 1.0 + 0.1 * jax.random.normal(ks[3], (c,), jnp.float32)
        b1 = 0.1 * jax.random.normal(ks[4], (c,), jnp.float32)
        g2 = 1.0 + 0.1 * jax.random.normal(ks[5], (c,), jnp.float32)
        b2 = 0.1 * jax.random.normal(ks[6], (c,), jnp.float32)
        return x, w1, g1, b1, w2, g2, b2

    # 1) base shape (N=2, C=8, L=16): single L tile, f32.
    args = make_inputs(2, 8, 16)
    out = jax.block_until_ready(basic_block_1d(*args))
    ref = reference_block(*args)
    assert out.shape == (2, 8, 16)
    err = float(jnp.max(jnp.abs(out - ref)))
    assert jnp.allclose(out, ref, rtol=5e-3, atol=5e-3), (
        "f32 single-tile mismatch, max abs err %e" % err)

    # 2) multi-tile grid (L=40 padded to 48 -> three 16-row tiles), f32.
    args2 = make_inputs(2, 8, 40)
    out2 = jax.block_until_ready(basic_block_1d(*args2, l_tile=16))
    ref2 = reference_block(*args2)
    err2 = float(jnp.max(jnp.abs(out2 - ref2)))
    assert jnp.allclose(out2, ref2, rtol=5e-3, atol=5e-3), (
        "f32 multi-tile mismatch, max abs err %e" % err2)

    # 3) bf16 activations/weights (f32 MXU accumulation + f32 BN math).
    out3 = jax.block_until_ready(
        basic_block_1d(*args2, l_tile=16, act_dtype=jnp.bfloat16))
    err3 = float(jnp.max(jnp.abs(out3 - ref2)))
    assert jnp.allclose(out3, ref2, rtol=1e-1, atol=1e-1), (
        "bf16 mismatch, max abs err %e" % err3)

    print("KERNEL_OK")
</pallas_src>

<mosaic_0001>
module attributes {stable_mosaic.version = 11 : i64} {
  func.func @_conv_stats_kernel(%arg0: i32, %arg1: i32, %arg2: memref<1x16x128xf32, #tpu.memory_space<vmem>>, %arg3: memref<1x16x128xf32, #tpu.memory_space<vmem>>, %arg4: memref<1x16x128xf32, #tpu.memory_space<vmem>>, %arg5: memref<3x128x128xf32, #tpu.memory_space<vmem>>, %arg6: memref<1x16x128xf32, #tpu.memory_space<vmem>>, %arg7: memref<1x2x8x128xf32, #tpu.memory_space<vmem>>) attributes {dimension_semantics = [#tpu.dimension_semantics<parallel>, #tpu.dimension_semantics<arbitrary>], iteration_bounds = array<i64: 2, 1>, scalar_prefetch = 0 : i64, scratch_operands = 0 : i64, tpu.core_type = #tpu.core_type<tc>, window_params = [{transform_indices = @transform_0, window_bounds = array<i64: 1, 16, 128>}, {transform_indices = @transform_1, window_bounds = array<i64: 1, 16, 128>}, {transform_indices = @transform_2, window_bounds = array<i64: 1, 16, 128>}, {pipeline_mode = #tpu.pipeline_mode<synchronous>, transform_indices = @transform_3, window_bounds = array<i64: 3, 128, 128>}, {transform_indices = @transform_4, window_bounds = array<i64: 1, 16, 128>}, {transform_indices = @transform_5, window_bounds = array<i64: 1, 2, 8, 128>}]} {
    %c16_i32 = arith.constant 16 : i32
    %0 = arith.muli %arg1, %c16_i32 : i32
    %c0 = arith.constant 0 : index
    %c15 = arith.constant 15 : index
    %c0_0 = arith.constant 0 : index
    %1 = vector.load %arg2[%c0, %c15, %c0_0] : memref<1x16x128xf32, #tpu.memory_space<vmem>>, vector<1x1x128xf32>
    %2 = vector.shape_cast %1 : vector<1x1x128xf32> to vector<1x128xf32>
    %c0_1 = arith.constant 0 : index
    %c0_2 = arith.constant 0 : index
    %c0_3 = arith.constant 0 : index
    %3 = vector.load %arg4[%c0_1, %c0_2, %c0_3] : memref<1x16x128xf32, #tpu.memory_space<vmem>>, vector<1x1x128xf32>
    %4 = vector.shape_cast %3 : vector<1x1x128xf32> to vector<1x128xf32>
    %c0_4 = arith.constant 0 : index
    %c0_5 = arith.constant 0 : index
    %c0_6 = arith.constant 0 : index
    %5 = vector.load %arg3[%c0_4, %c0_5, %c0_6] : memref<1x16x128xf32, #tpu.memory_space<vmem>>, vector<1x16x128xf32>
    %6 = vector.shape_cast %5 : vector<1x16x128xf32> to vector<16x128xf32>
    %7 = tpu.concatenate %2, %6, %4 in 0 : vector<1x128xf32>, vector<16x128xf32>, vector<1x128xf32> -> vector<18x128xf32>
    %c1_i32 = arith.constant 1 : i32
    %8 = arith.subi %0, %c1_i32 : i32
    %9 = tpu.iota {dimensions = array<i32: 0>} : vector<18x1xi32>
    %10 = vector.broadcast %8 : i32 to vector<18x1xi32>
    %11 = arith.addi %10, %9 : vector<18x1xi32>
    %c0_i32 = arith.constant 0 : i32
    %12 = vector.broadcast %c0_i32 : i32 to vector<18x1xi32>
    %13 = arith.cmpi sge, %11, %12 : vector<18x1xi32>
    %c16_i32_7 = arith.constant 16 : i32
    %14 = vector.broadcast %c16_i32_7 : i32 to vector<18x1xi32>
    %15 = arith.cmpi slt, %11, %14 : vector<18x1xi32>
    %16 = arith.andi %13, %15 : vector<18x1xi1>
    %cst = arith.constant 0.000000e+00 : f32
    %17 = vector.broadcast %cst : f32 to vector<18x128xf32>
    %18 = vector.shape_cast %16 : vector<18x1xi1> to vector<18x1xi1>
    %19 = vector.broadcast %18 : vector<18x1xi1> to vector<18x128xi1>
    %20 = arith.select %19, %7, %17 : vector<18x128xi1>, vector<18x128xf32>
    %21 = vector.extract_strided_slice %20 {offsets = [0, 0], sizes = [16, 128], strides = [1, 1]} : vector<18x128xf32> to vector<16x128xf32>
    %c0_8 = arith.constant 0 : index
    %c0_9 = arith.constant 0 : index
    %c0_10 = arith.constant 0 : index
    %22 = vector.load %arg5[%c0_8, %c0_9, %c0_10] : memref<3x128x128xf32, #tpu.memory_space<vmem>>, vector<1x128x128xf32>
    %23 = vector.shape_cast %22 : vector<1x128x128xf32> to vector<128x128xf32>
    %cst_11 = arith.constant dense<0.000000e+00> : vector<16x128xf32>
    %24 = tpu.matmul %21, %23, %cst_11 {dimension_numbers = #tpu.dot_dimension_numbers<[1], [0], [0], [1], [0, 0, 1, 1], [], []>} : vector<16x128xf32>, vector<128x128xf32>, vector<16x128xf32> -> vector<16x128xf32>
    %25 = vector.extract_strided_slice %20 {offsets = [1, 0], sizes = [16, 128], strides = [1, 1]} : vector<18x128xf32> to vector<16x128xf32>
    %c1 = arith.constant 1 : index
    %c0_12 = arith.constant 0 : index
    %c0_13 = arith.constant 0 : index
    %26 = vector.load %arg5[%c1, %c0_12, %c0_13] : memref<3x128x128xf32, #tpu.memory_space<vmem>>, vector<1x128x128xf32>
    %27 = vector.shape_cast %26 : vector<1x128x128xf32> to vector<128x128xf32>
    %cst_14 = arith.constant dense<0.000000e+00> : vector<16x128xf32>
    %28 = tpu.matmul %25, %27, %cst_14 {dimension_numbers = #tpu.dot_dimension_numbers<[1], [0], [0], [1], [0, 0, 1, 1], [], []>} : vector<16x128xf32>, vector<128x128xf32>, vector<16x128xf32> -> vector<16x128xf32>
    %29 = arith.addf %24, %28 : vector<16x128xf32>
    %30 = vector.extract_strided_slice %20 {offsets = [2, 0], sizes = [16, 128], strides = [1, 1]} : vector<18x128xf32> to vector<16x128xf32>
    %c2 = arith.constant 2 : index
    %c0_15 = arith.constant 0 : index
    %c0_16 = arith.constant 0 : index
    %31 = vector.load %arg5[%c2, %c0_15, %c0_16] : memref<3x128x128xf32, #tpu.memory_space<vmem>>, vector<1x128x128xf32>
    %32 = vector.shape_cast %31 : vector<1x128x128xf32> to vector<128x128xf32>
    %cst_17 = arith.constant dense<0.000000e+00> : vector<16x128xf32>
    %33 = tpu.matmul %30, %32, %cst_17 {dimension_numbers = #tpu.dot_dimension_numbers<[1], [0], [0], [1], [0, 0, 1, 1], [], []>} : vector<16x128xf32>, vector<128x128xf32>, vector<16x128xf32> -> vector<16x128xf32>
    %34 = arith.addf %29, %33 : vector<16x128xf32>
    %35 = tpu.iota {dimensions = array<i32: 0>} : vector<16x1xi32>
    %36 = vector.broadcast %0 : i32 to vector<16x1xi32>
    %37 = arith.addi %36, %35 : vector<16x1xi32>
    %c16_i32_18 = arith.constant 16 : i32
    %38 = vector.broadcast %c16_i32_18 : i32 to vector<16x1xi32>
    %39 = arith.cmpi slt, %37, %38 : vector<16x1xi32>
    %cst_19 = arith.constant 0.000000e+00 : f32
    %40 = vector.shape_cast %39 : vector<16x1xi1> to vector<16x1xi1>
    %41 = vector.broadcast %40 : vector<16x1xi1> to vector<16x128xi1>
    %42 = vector.broadcast %cst_19 : f32 to vector<16x128xf32>
    %43 = arith.select %41, %34, %42 : vector<16x128xi1>, vector<16x128xf32>
    %c0_20 = arith.constant 0 : index
    %c0_21 = arith.constant 0 : index
    %c0_22 = arith.constant 0 : index
    %44 = vector.load %arg6[%c0_20, %c0_21, %c0_22] : memref<1x16x128xf32, #tpu.memory_space<vmem>>, vector<1x16x128xf32>
    %45 = vector.shape_cast %44 : vector<1x16x128xf32> to vector<16x128xf32>
    %46 = vector.shape_cast %43 : vector<16x128xf32> to vector<1x16x128xf32>
    tpu.vector_store %arg6[%c0_20, %c0_21, %c0_22], %46 {strides = array<i32>} : memref<1x16x128xf32, #tpu.memory_space<vmem>>, vector<1x16x128xf32>,
    %c0_i32_23 = arith.constant 0 : i32
    %47 = arith.cmpi eq, %arg1, %c0_i32_23 : i32
    %48 = arith.extui %47 : i1 to i32
    %c0_i32_24 = arith.constant 0 : i32
    %49 = arith.cmpi ne, %48, %c0_i32_24 : i32
    scf.if %49 {
      %cst_43 = arith.constant 0.000000e+00 : f32
      %66 = vector.broadcast %cst_43 : f32 to vector<1x2x8x128xf32>
      %c0_44 = arith.constant 0 : index
      %c0_45 = arith.constant 0 : index
      %c0_46 = arith.constant 0 : index
      %c0_47 = arith.constant 0 : index
      %67 = vector.load %arg7[%c0_44, %c0_45, %c0_46, %c0_47] : memref<1x2x8x128xf32, #tpu.memory_space<vmem>>, vector<1x2x8x128xf32>
      tpu.vector_store %arg7[%c0_44, %c0_45, %c0_46, %c0_47], %66 {strides = array<i32>} : memref<1x2x8x128xf32, #tpu.memory_space<vmem>>, vector<1x2x8x128xf32>,
    } else {
    }
    %50 = vector.shape_cast %43 : vector<16x128xf32> to vector<2x8x128xf32>
    %c0_25 = arith.constant 0 : index
    %c0_26 = arith.constant 0 : index
    %c0_27 = arith.constant 0 : index
    %c0_28 = arith.constant 0 : index
    %51 = vector.load %arg7[%c0_25, %c0_26, %c0_27, %c0_28] : memref<1x2x8x128xf32, #tpu.memory_space<vmem>>, vector<1x1x8x128xf32>
    %52 = vector.shape_cast %51 : vector<1x1x8x128xf32> to vector<8x128xf32>
    %cst_29 = arith.constant dense<0.000000e+00> : vector<8x128xf32>
    %53 = vector.multi_reduction <add>, %50, %cst_29 [0] : vector<2x8x128xf32> to vector<8x128xf32>
    %54 = arith.addf %52, %53 : vector<8x128xf32>
    %c0_30 = arith.constant 0 : index
    %c0_31 = arith.constant 0 : index
    %c0_32 = arith.constant 0 : index
    %c0_33 = arith.constant 0 : index
    %55 = vector.load %arg7[%c0_30, %c0_31, %c0_32, %c0_33] : memref<1x2x8x128xf32, #tpu.memory_space<vmem>>, vector<1x1x8x128xf32>
    %56 = vector.shape_cast %55 : vector<1x1x8x128xf32> to vector<8x128xf32>
    %57 = vector.shape_cast %54 : vector<8x128xf32> to vector<1x1x8x128xf32>
    tpu.vector_store %arg7[%c0_30, %c0_31, %c0_32, %c0_33], %57 {strides = array<i32>} : memref<1x2x8x128xf32, #tpu.memory_space<vmem>>, vector<1x1x8x128xf32>,
    %c0_34 = arith.constant 0 : index
    %c1_35 = arith.constant 1 : index
    %c0_36 = arith.constant 0 : index
    %c0_37 = arith.constant 0 : index
    %58 = vector.load %arg7[%c0_34, %c1_35, %c0_36, %c0_37] : memref<1x2x8x128xf32, #tpu.memory_space<vmem>>, vector<1x1x8x128xf32>
    %59 = vector.shape_cast %58 : vector<1x1x8x128xf32> to vector<8x128xf32>
    %60 = arith.mulf %50, %50 : vector<2x8x128xf32>
    %cst_38 = arith.constant dense<0.000000e+00> : vector<8x128xf32>
    %61 = vector.multi_reduction <add>, %60, %cst_38 [0] : vector<2x8x128xf32> to vector<8x128xf32>
    %62 = arith.addf %59, %61 : vector<8x128xf32>
    %c0_39 = arith.constant 0 : index
    %c1_40 = arith.constant 1 : index
    %c0_41 = arith.constant 0 : index
    %c0_42 = arith.constant 0 : index
    %63 = vector.load %arg7[%c0_39, %c1_40, %c0_41, %c0_42] : memref<1x2x8x128xf32, #tpu.memory_space<vmem>>, vector<1x1x8x128xf32>
    %64 = vector.shape_cast %63 : vector<1x1x8x128xf32> to vector<8x128xf32>
    %65 = vector.shape_cast %62 : vector<8x128xf32> to vector<1x1x8x128xf32>
    tpu.vector_store %arg7[%c0_39, %c1_40, %c0_41, %c0_42], %65 {strides = array<i32>} : memref<1x2x8x128xf32, #tpu.memory_space<vmem>>, vector<1x1x8x128xf32>,
    return
  }
  func.func @transform_0(%arg0: i32, %arg1: i32) -> (i32, i32, i32) {
    %c1_i32 = arith.constant 1 : i32
    %0 = arith.muli %arg1, %c1_i32 : i32
    %c1_i32_0 = arith.constant 1 : i32
    %1 = arith.subi %0, %c1_i32_0 : i32
    %c0_i32 = arith.constant 0 : i32
    %2 = arith.maxsi %1, %c0_i32 : i32
    %c0_i32_1 = arith.constant 0 : i32
    %c0_i32_2 = arith.constant 0 : i32
    return %arg0, %2, %c0_i32_1 : i32, i32, i32
  }
  func.func @transform_1(%arg0: i32, %arg1: i32) -> (i32, i32, i32) {
    %c0_i32 = arith.constant 0 : i32
    %c0_i32_0 = arith.constant 0 : i32
    return %arg0, %arg1, %c0_i32 : i32, i32, i32
  }
  func.func @transform_2(%arg0: i32, %arg1: i32) -> (i32, i32, i32) {
    %c1_i32 = arith.constant 1 : i32
    %0 = arith.addi %arg1, %c1_i32 : i32
    %c1_i32_0 = arith.constant 1 : i32
    %1 = arith.muli %0, %c1_i32_0 : i32
    %c0_i32 = arith.constant 0 : i32
    %2 = arith.minsi %1, %c0_i32 : i32
    %c0_i32_1 = arith.constant 0 : i32
    %c0_i32_2 = arith.constant 0 : i32
    return %arg0, %2, %c0_i32_1 : i32, i32, i32
  }
  func.func @transform_3(%arg0: i32, %arg1: i32) -> (i32, i32, i32) {
    %c0_i32 = arith.constant 0 : i32
    %c0_i32_0 = arith.constant 0 : i32
    %c0_i32_1 = arith.constant 0 : i32
    %c0_i32_2 = arith.constant 0 : i32
    return %c0_i32, %c0_i32_0, %c0_i32_1 : i32, i32, i32
  }
  func.func @transform_4(%arg0: i32, %arg1: i32) -> (i32, i32, i32) {
    %c0_i32 = arith.constant 0 : i32
    %c0_i32_0 = arith.constant 0 : i32
    return %arg0, %arg1, %c0_i32 : i32, i32, i32
  }
  func.func @transform_5(%arg0: i32, %arg1: i32) -> (i32, i32, i32, i32) {
    %c0_i32 = arith.constant 0 : i32
    %c0_i32_0 = arith.constant 0 : i32
    %c0_i32_1 = arith.constant 0 : i32
    %c0_i32_2 = arith.constant 0 : i32
    return %arg0, %c0_i32, %c0_i32_0, %c0_i32_1 : i32, i32, i32, i32
  }
}

</mosaic_0001>

<llo_original>
// kernel: tpu_custom_call.1
$region0: #{tpu_custom_call.1}
  #allocation0 [shape = 'u32[]', space=smem, size = 0x4, offset = 0x4, fixed_abs, tag = 'smem constant byte address 0x4 - core index']
  #allocation1 [shape = 'u32[144,128]{1,0:T(1,128)}', space=vmem, size = 0x12000, scoped, tag = 'internal scratch']
  %s0 = inlined_call_operand.hbm [shape: f32[2,16,128], index: 0, kind: input, shape index: {}]
  %s1 = inlined_call_operand.hbm [shape: f32[2,16,128], index: 1, kind: input, shape index: {}]
  %s2 = inlined_call_operand.hbm [shape: f32[2,16,128], index: 2, kind: input, shape index: {}]
  %s3 = inlined_call_operand.hbm [shape: f32[3,128,128], index: 3, kind: input, shape index: {}]
  %s4 = inlined_call_operand.hbm [shape: f32[2,16,128], index: 4, kind: output, shape index: {0}]
  %s5 = inlined_call_operand.hbm [shape: f32[2,2,8,128], index: 5, kind: output, shape index: {1}]
  %6 = xla_tuple %s4, %s5
  %s7 = sld [smem:[#allocation0]]
  $region77: #{tpu_custom_call.1} parent=0
    _
  %s9 = ssub.s32 1, %s7
  %s10 = scalar_select 0, %s9, %s7
  $region1: #{tpu_custom_call.1} parent=0
    #allocation2 [shape = 'u8[16384]{0}', space=vmem, size = 0x4000, scoped, tag = 'input window, operand 0']
    #allocation3 [shape = 's32[2]{0}', space=sflag, size = 0x8, scoped, tag = 'scoped memory for tpu_custom_call.1']
    #allocation4 [shape = 's32[2]{0}', space=sflag, size = 0x8, scoped, tag = 'scoped memory for tpu_custom_call.1']
    #allocation5 [shape = 'u8[16384]{0}', space=vmem, size = 0x4000, scoped, tag = 'input window, operand 1']
    #allocation6 [shape = 's32[2]{0}', space=sflag, size = 0x8, scoped, tag = 'scoped memory for tpu_custom_call.1']
    #allocation7 [shape = 'u8[16384]{0}', space=vmem, size = 0x4000, scoped, tag = 'input window, operand 2']
    #allocation8 [shape = 'u8[196608]{0}', space=vmem, size = 0x30000, scoped, tag = 'input window, operand 3, single buffered']
    #allocation9 [shape = 's32[1]{0}', space=sflag, size = 0x4, scoped, tag = 'scoped memory for tpu_custom_call.1']
    #allocation10 [shape = 'u8[16384]{0}', space=vmem, size = 0x4000, scoped, tag = 'output window, operand 0']
    #allocation11 [shape = 'u8[16384]{0}', space=vmem, size = 0x4000, scoped, tag = 'output window, operand 1']
    #allocation12 [shape = 's32[2]{0}', space=sflag, size = 0x8, scoped, tag = 'scoped memory for tpu_custom_call.1']
    %11 = vsyncpa [#allocation3], 0
    %s12 = scalar_lea.sflag [#allocation3], 1
    %13 = vsyncpa %s12, 0
    %14 = vsyncpa [#allocation6], 0
    %s15 = scalar_lea.sflag [#allocation6], 1
    %16 = vsyncpa %s15, 0
    %17 = vsyncpa [#allocation9], 0
    %18 = vsyncpa [#allocation4], 0
    %s19 = scalar_lea.sflag [#allocation4], 1
    %20 = vsyncpa %s19, 0
    %21 = vsyncpa [#allocation12], 0
    %s22 = scalar_lea.sflag [#allocation12], 1
    %23 = vsyncpa %s22, 0
    loop: start=0, step=1, limit=4
    $region2: #{tpu_custom_call.1} parent=1 // loop_pre_header
      _
    $region3: #{tpu_custom_call.1} parent=1 // loop_header
      %s25 = sphi 0, %s29
      %p26 = scmp.ge.s32.totalorder %s25, 4
      %s32 = sphi 0, %s44
      %s33 = sphi 0, %s40
      %s34 = sphi 0, %s32
      %s35 = sphi 0, %s33
      %s36 = sphi 0, %s34
      %s37 = sphi 0, %s35
      %s55 = sphi 0, %s57
      %s58 = sphi 0, %s55
      %s59 = sphi 0, %s58
      %s75 = sphi 0, %s59
      %s83 = sphi 0, %s85
      %s86 = sphi 0, %s83
      %s87 = sphi 0, %s86
      %s103 = sphi 0, %s87
      %s117 = sphi 0, %s119
      %s120 = sphi 0, %s117
      %s121 = sphi 0, %s120
      %s137 = sphi 0, %s121
      %s141 = sphi 0, %s141
      %s143 = sphi 0, %s141
      %s144 = sphi 0, %s143
      %s158 = sphi 0, %s144
      %s166 = sphi 0, %s168
      %s169 = sphi 0, %s166
      %s170 = sphi 0, %s169
      %s186 = sphi 0, %s170
      %s192 = sphi 0, %s194
      %s195 = sphi 0, %s192
      %s196 = sphi 0, %s195
      %s212 = sphi 0, %s196
    $region4: #{tpu_custom_call.1} parent=1 // loop_header_branch
      %28 = sbr.rel (%p26) target = $region8
    $region5: #{tpu_custom_call.1} parent=1 // loop_body
      %s30 = ssub.s32 %s25, 1
      %s31 = ssub.s32 %s25, 2
      %s38 = sadd.s32 1, %s33
      %p39 = scmp.ge.s32.totalorder %s38, 1
      %s40 = scalar_select %p39, 0, %s38
      %s41 = sadd.s32 1, %s32
      %s42 = scalar_select %p39, %s41, %s32
      %p43 = scmp.ge.s32.totalorder %s42, 2
      %s44 = scalar_select %p43, 0, %s42
      %s45 = ssub.s32 %s33, 1
      %p46 = scmp.gt.s32.totalorder %s45, 0
      %s47 = scalar_select %p46, %s45, 0
      %s48 = ssub.s32 %s40, 1
      %p49 = scmp.gt.s32.totalorder %s48, 0
      %s50 = scalar_select %p49, %s48, 0
      %s51 = ssub.s32 %s32, %s44
      %s52 = ssub.s32 %s47, %s50
      %s53 = sor.u32 %s51, %s52
      %p54 = scmp.eq.s32.totalorder %s53, 0
      %s56 = sadd.s32 %s55, 1
      %s57 = scalar_select %p54, %s55, %s56
      %p60 = pneg %p54
      %p61 = scmp.eq.s32.totalorder %s25, 1
      %p62 = por %p60, %p61
      %p63 = scmp.ne.s32.totalorder %s55, %s58
      %p64 = scmp.eq.s32.totalorder %s25, 0
      %p65 = por %p63, %p64
      %p66 = scmp.ne.s32.totalorder %s55, %s58
      %p67 = scmp.eq.s32.totalorder %s30, 1
      %p68 = por %p66, %p67
      %p69 = scmp.ne.s32.totalorder %s58, %s59
      %p70 = scmp.eq.s32.totalorder %s30, 0
      %p71 = por %p69, %p70
      %p72 = scmp.ne.s32.totalorder %s58, %s59
      %p73 = scmp.eq.s32.totalorder %s31, 1
      %p74 = por %p72, %p73
      %p76 = scmp.ne.s32.totalorder %s59, %s75
      %p77 = scmp.eq.s32.totalorder %s31, 0
      %p78 = por %p76, %p77
      %s79 = ssub.s32 %s32, %s44
      %s80 = ssub.s32 %s33, %s40
      %s81 = sor.u32 %s79, %s80
      %p82 = scmp.eq.s32.totalorder %s81, 0
      %s84 = sadd.s32 %s83, 1
      %s85 = scalar_select %p82, %s83, %s84
      %p88 = pneg %p82
      %p89 = scmp.eq.s32.totalorder %s25, 1
      %p90 = por %p88, %p89
      %p91 = scmp.ne.s32.totalorder %s83, %s86
      %p92 = scmp.eq.s32.totalorder %s25, 0
      %p93 = por %p91, %p92
      %p94 = scmp.ne.s32.totalorder %s83, %s86
      %p95 = scmp.eq.s32.totalorder %s30, 1
      %p96 = por %p94, %p95
      %p97 = scmp.ne.s32.totalorder %s86, %s87
      %p98 = scmp.eq.s32.totalorder %s30, 0
      %p99 = por %p97, %p98
      %p100 = scmp.ne.s32.totalorder %s86, %s87
      %p101 = scmp.eq.s32.totalorder %s31, 1
      %p102 = por %p100, %p101
      %p104 = scmp.ne.s32.totalorder %s87, %s103
      %p105 = scmp.eq.s32.totalorder %s31, 0
      %p106 = por %p104, %p105
      %s107 = sadd.s32 %s33, 1
      %p108 = scmp.lt.s32.totalorder %s107, 0
      %s109 = scalar_select %p108, %s107, 0
      %s110 = sadd.s32 %s40, 1
      %p111 = scmp.lt.s32.totalorder %s110, 0
      %s112 = scalar_select %p111, %s110, 0
      %s113 = ssub.s32 %s32, %s44
      %s114 = ssub.s32 %s109, %s112
      %s115 = sor.u32 %s113, %s114
      %p116 = scmp.eq.s32.totalorder %s115, 0
      %s118 = sadd.s32 %s117, 1
      %s119 = scalar_select %p116, %s117, %s118
      %p122 = pneg %p116
      %p123 = scmp.eq.s32.totalorder %s25, 1
      %p124 = por %p122, %p123
      %p125 = scmp.ne.s32.totalorder %s117, %s120
      %p126 = scmp.eq.s32.totalorder %s25, 0
      %p127 = por %p125, %p126
      %p128 = scmp.ne.s32.totalorder %s117, %s120
      %p129 = scmp.eq.s32.totalorder %s30, 1
      %p130 = por %p128, %p129
      %p131 = scmp.ne.s32.totalorder %s120, %s121
      %p132 = scmp.eq.s32.totalorder %s30, 0
      %p133 = por %p131, %p132
      %p134 = scmp.ne.s32.totalorder %s120, %s121
      %p135 = scmp.eq.s32.totalorder %s31, 1
      %p136 = por %p134, %p135
      %p138 = scmp.ne.s32.totalorder %s121, %s137
      %p139 = scmp.eq.s32.totalorder %s31, 0
      %p140 = por %p138, %p139
      %s142 = sadd.s32 %s141, 1
      %p145 = scmp.eq.s32.totalorder %s25, 1
      %p146 = scmp.ne.s32.totalorder %s141, %s143
      %p147 = scmp.eq.s32.totalorder %s25, 0
      %p148 = por %p146, %p147
      %p149 = scmp.ne.s32.totalorder %s141, %s143
      %p150 = scmp.eq.s32.totalorder %s30, 1
      %p151 = por %p149, %p150
      %p152 = scmp.ne.s32.totalorder %s143, %s144
      %p153 = scmp.eq.s32.totalorder %s30, 0
      %p154 = por %p152, %p153
      %p155 = scmp.ne.s32.totalorder %s143, %s144
      %p156 = scmp.eq.s32.totalorder %s31, 1
      %p157 = por %p155, %p156
      %p159 = scmp.ne.s32.totalorder %s144, %s158
      %p160 = scmp.eq.s32.totalorder %s31, 0
      %p161 = por %p159, %p160
      %s162 = ssub.s32 %s32, %s44
      %s163 = ssub.s32 %s33, %s40
      %s164 = sor.u32 %s162, %s163
      %p165 = scmp.eq.s32.totalorder %s164, 0
      %s167 = sadd.s32 %s166, 1
      %s168 = scalar_select %p165, %s166, %s167
      %p171 = pneg %p165
      %p172 = scmp.eq.s32.totalorder %s25, 1
      %p173 = por %p171, %p172
      %p174 = scmp.ne.s32.totalorder %s166, %s169
      %p175 = scmp.eq.s32.totalorder %s25, 0
      %p176 = por %p174, %p175
      %p177 = scmp.ne.s32.totalorder %s166, %s169
      %p178 = scmp.eq.s32.totalorder %s30, 1
      %p179 = por %p177, %p178
      %p180 = scmp.ne.s32.totalorder %s169, %s170
      %p181 = scmp.eq.s32.totalorder %s30, 0
      %p182 = por %p180, %p181
      %p183 = scmp.ne.s32.totalorder %s169, %s170
      %p184 = scmp.eq.s32.totalorder %s31, 1
      %p185 = por %p183, %p184
      %p187 = scmp.ne.s32.totalorder %s170, %s186
      %p188 = scmp.eq.s32.totalorder %s31, 0
      %p189 = por %p187, %p188
      %s190 = ssub.s32 %s32, %s44
      %p191 = scmp.eq.s32.totalorder %s190, 0
      %s193 = sadd.s32 %s192, 1
      %s194 = scalar_select %p191, %s192, %s193
      %p197 = pneg %p191
      %p198 = scmp.eq.s32.totalorder %s25, 1
      %p199 = por %p197, %p198
      %p200 = scmp.ne.s32.totalorder %s192, %s195
      %p201 = scmp.eq.s32.totalorder %s25, 0
      %p202 = por %p200, %p201
      %p203 = scmp.ne.s32.totalorder %s192, %s195
      %p204 = scmp.eq.s32.totalorder %s30, 1
      %p205 = por %p203, %p204
      %p206 = scmp.ne.s32.totalorder %s195, %s196
      %p207 = scmp.eq.s32.totalorder %s30, 0
      %p208 = por %p206, %p207
      %p209 = scmp.ne.s32.totalorder %s195, %s196
      %p210 = scmp.eq.s32.totalorder %s31, 1
      %p211 = por %p209, %p210
      %p213 = scmp.ne.s32.totalorder %s196, %s212
      %p214 = scmp.eq.s32.totalorder %s31, 0
      %p215 = por %p213, %p214
      %p216 = scmp.le.s32.totalorder 1, %s25
      %p217 = scmp.lt.s32.totalorder %s25, 3
      %p218 = pnand %p216, %p217
      %p219 = pneg %p218
      // Predicated region
      $region9: #{tpu_custom_call.1} parent=5 // pred_check
        _
      $region10: #{tpu_custom_call.1} parent=5 // pred_check_branch
        %221 = sbr.rel (%p218) target = $region12
      $region11: #{tpu_custom_call.1} parent=5 // pred_region
        %s222 = ssub.s32 %s25, 1
        // Predicated region
        $region13: #{tpu_custom_call.1} parent=11 // pred_check
          %p223 = pneg %p154
        $region14: #{tpu_custom_call.1} parent=11 // pred_check_branch
          %225 = sbr.rel (%p223) target = $region16
        $region15: #{tpu_custom_call.1} parent=11 // pred_region
          %s227 = ssub.s32 6144, 6144
          %228 = vsyncadd [#allocation9], %s227
          %s229 = sshll.u32 [#allocation8], 4
          %s230 = int_to_ptr.vmem [resolvable:$true] %s229
          %235 = dma.hbm_to_vmem [thread:$0]  %s3, 6144, %s230, [#allocation9], 128, 128, 8
        $region16: #{tpu_custom_call.1} parent=11 // pred_fallthru
          _
      $region12: #{tpu_custom_call.1} parent=5 // pred_fallthru
        _
      %p236 = scmp.lt.s32.totalorder %s25, 2
      // Predicated region
      $region17: #{tpu_custom_call.1} parent=5 // pred_check
        %p237 = pneg %p236
      $region18: #{tpu_custom_call.1} parent=5 // pred_check_branch
        %239 = sbr.rel (%p237) target = $region20
      $region19: #{tpu_custom_call.1} parent=5 // pred_region
        // Predicated region
        $region21: #{tpu_custom_call.1} parent=19 // pred_check
          %p240 = pneg %p65
        $region22: #{tpu_custom_call.1} parent=19 // pred_check_branch
          %242 = sbr.rel (%p240) target = $region24
        $region23: #{tpu_custom_call.1} parent=19 // pred_region
          %s243 = sand.u32 %s55, 1
          %s244 = scalar_lea.sflag [#allocation3], %s243
          %s245 = sand.u32 %s55, 1
          %s246 = smul.addr %s245, 16
          %s247 = scalar_lea.vmem [#allocation2], %s246
          %s248 = ssub.s32 %s33, 1
          %p249 = scmp.gt.s32.totalorder %s248, 0
          %s250 = scalar_select %p249, %s248, 0
          %s251 = smul.u32 2, %s250
          %s253 = ssub.s32 256, 256
          %254 = vsyncadd %s244, %s253
          %s255 = smul.addr %s32, 2
          %s256 = sadd.s32 %s251, %s255
          %s257 = smul.addr %s256, 128
          %s258 = scalar_lea.hbm %s0, %s257
          %s259 = sshll.u32 %s247, 4
          %s260 = int_to_ptr.vmem [resolvable:$true] %s259
          %265 = dma.hbm_to_vmem [thread:$0]  %s258, 256, %s260, %s244, 128, 128, 8
        $region24: #{tpu_custom_call.1} parent=19 // pred_fallthru
          _
        // Predicated region
        $region25: #{tpu_custom_call.1} parent=19 // pred_check
          %p266 = pneg %p93
        $region26: #{tpu_custom_call.1} parent=19 // pred_check_branch
          %268 = sbr.rel (%p266) target = $region28
        $region27: #{tpu_custom_call.1} parent=19 // pred_region
          %s269 = sand.u32 %s25, 1
          %s270 = scalar_lea.sflag [#allocation6], %s269
          %s271 = sand.u32 %s83, 1
          %s272 = smul.addr %s271, 16
          %s273 = scalar_lea.vmem [#allocation5], %s272
          %s274 = smul.u32 2, %s33
          %s276 = ssub.s32 256, 256
          %277 = vsyncadd %s270, %s276
          %s278 = smul.addr %s32, 2
          %s279 = sadd.s32 %s274, %s278
          %s280 = smul.addr %s279, 128
          %s281 = scalar_lea.hbm %s1, %s280
          %s282 = sshll.u32 %s273, 4
          %s283 = int_to_ptr.vmem [resolvable:$true] %s282
          %288 = dma.hbm_to_vmem [thread:$0]  %s281, 256, %s283, %s270, 128, 128, 8
        $region28: #{tpu_custom_call.1} parent=19 // pred_fallthru
          _
        // Predicated region
        $region29: #{tpu_custom_call.1} parent=19 // pred_check
          %p289 = pneg %p127
        $region30: #{tpu_custom_call.1} parent=19 // pred_check_branch
          %291 = sbr.rel (%p289) target = $region32
        $region31: #{tpu_custom_call.1} parent=19 // pred_region
          %s292 = sand.u32 %s25, 1
          %s293 = scalar_lea.sflag [#allocation6], %s292
          %s294 = sand.u32 %s117, 1
          %s295 = smul.addr %s294, 16
          %s296 = scalar_lea.vmem [#allocation7], %s295
          %s297 = sadd.s32 %s33, 1
          %p298 = scmp.lt.s32.totalorder %s297, 0
          %s299 = scalar_select %p298, %s297, 0
          %s300 = smul.u32 2, %s299
          %s302 = ssub.s32 256, 256
          %303 = vsyncadd %s293, %s302
          %s304 = smul.addr %s32, 2
          %s305 = sadd.s32 %s300, %s304
          %s306 = smul.addr %s305, 128
          %s307 = scalar_lea.hbm %s2, %s306
          %s308 = sshll.u32 %s296, 4
          %s309 = int_to_ptr.vmem [resolvable:$true] %s308
          %314 = dma.hbm_to_vmem [thread:$0]  %s307, 256, %s309, %s293, 128, 128, 8
        $region32: #{tpu_custom_call.1} parent=19 // pred_fallthru
          _
      $region20: #{tpu_custom_call.1} parent=5 // pred_fallthru
        _
      %p315 = scmp.le.s32.totalorder 1, %s25
      %p316 = scmp.lt.s32.totalorder %s25, 3
      %p317 = pnand %p315, %p316
      %p318 = pneg %p317
      // Predicated region
      $region33: #{tpu_custom_call.1} parent=5 // pred_check
        _
      $region34: #{tpu_custom_call.1} parent=5 // pred_check_branch
        %320 = sbr.rel (%p317) target = $region36
      $region35: #{tpu_custom_call.1} parent=5 // pred_region
        %s321 = ssub.s32 %s25, 1
        %s322 = sand.u32 %s58, 1
        %s323 = scalar_lea.sflag [#allocation3], %s322
        %s324 = sand.u32 %s58, 1
        %s325 = smul.addr %s324, 16
        %s326 = scalar_lea.vmem [#allocation2], %s325
        // Predicated region
        $region37: #{tpu_custom_call.1} parent=35 // pred_check
          %p327 = pneg %p71
        $region38: #{tpu_custom_call.1} parent=35 // pred_check_branch
          %329 = sbr.rel (%p327) target = $region40
        $region39: #{tpu_custom_call.1} parent=35 // pred_region
          %330 = dma.done %s323, 256
        $region40: #{tpu_custom_call.1} parent=35 // pred_fallthru
          _
        %s331 = sand.u32 %s30, 1
        %s332 = scalar_lea.sflag [#allocation6], %s331
        %s333 = sand.u32 %s86, 1
        %s334 = smul.addr %s333, 16
        %s335 = scalar_lea.vmem [#allocation5], %s334
        // Predicated region
        $region41: #{tpu_custom_call.1} parent=35 // pred_check
          %p336 = pneg %p99
        $region42: #{tpu_custom_call.1} parent=35 // pred_check_branch
          %338 = sbr.rel (%p336) target = $region44
        $region43: #{tpu_custom_call.1} parent=35 // pred_region
          %339 = dma.done %s332, 256
        $region44: #{tpu_custom_call.1} parent=35 // pred_fallthru
          _
        %s340 = sand.u32 %s30, 1
        %s341 = scalar_lea.sflag [#allocation6], %s340
        %s342 = sand.u32 %s120, 1
        %s343 = smul.addr %s342, 16
        %s344 = scalar_lea.vmem [#allocation7], %s343
        // Predicated region
        $region45: #{tpu_custom_call.1} parent=35 // pred_check
          %p345 = pneg %p133
        $region46: #{tpu_custom_call.1} parent=35 // pred_check_branch
          %347 = sbr.rel (%p345) target = $region48
        $region47: #{tpu_custom_call.1} parent=35 // pred_region
          %348 = dma.done %s341, 256
        $region48: #{tpu_custom_call.1} parent=35 // pred_fallthru
          _
        // Predicated region
        $region49: #{tpu_custom_call.1} parent=35 // pred_check
          %p349 = pneg %p154
        $region50: #{tpu_custom_call.1} parent=35 // pred_check_branch
          %351 = sbr.rel (%p349) target = $region52
        $region51: #{tpu_custom_call.1} parent=35 // pred_region
          %352 = dma.done [#allocation9], 6144
        $region52: #{tpu_custom_call.1} parent=35 // pred_fallthru
          _
        %s353 = sand.u32 %s58, 1
        %s354 = scalar_lea.sflag [#allocation3], %s353
        %s355 = sand.u32 %s58, 1
        %s356 = smul.addr %s355, 16
        %s357 = scalar_lea.vmem [#allocation2], %s356
        %p358 = pneg %p71
        %p359 = pneg %p68
        %s360 = sand.u32 %s30, 1
        %s361 = scalar_lea.sflag [#allocation6], %s360
        %s362 = sand.u32 %s86, 1
        %s363 = smul.addr %s362, 16
        %s364 = scalar_lea.vmem [#allocation5], %s363
        %p365 = pneg %p99
        %p366 = pneg %p96
        %s367 = sand.u32 %s30, 1
        %s368 = scalar_lea.sflag [#allocation6], %s367
        %s369 = sand.u32 %s120, 1
        %s370 = smul.addr %s369, 16
        %s371 = scalar_lea.vmem [#allocation7], %s370
        %p372 = pneg %p133
        %p373 = pneg %p130
        %p374 = pneg %p154
        %p375 = pneg %p151
        %p376 = pneg %p182
        %p377 = pneg %p179
        %s378 = sand.u32 %s169, 1
        %s379 = scalar_lea.sflag [#allocation4], %s378
        %s380 = sand.u32 %s169, 1
        %s381 = smul.addr %s380, 16
        %s382 = scalar_lea.vmem [#allocation10], %s381
        %p383 = pneg %p208
        %p384 = pneg %p205
        %s385 = sand.u32 %s195, 1
        %s386 = scalar_lea.sflag [#allocation12], %s385
        %s387 = sand.u32 %s195, 1
        %s388 = smul.addr %s387, 16
        %s389 = scalar_lea.vmem [#allocation11], %s388
        %s390 = ssub.s32 %s35, 1
        %p391 = scmp.gt.s32.totalorder %s390, 0
        %s392 = scalar_select %p391, %s390, 0
        %s393 = smul.u32 2, %s392
        %s394 = smul.u32 2, %s35
        %s395 = sadd.s32 %s35, 1
        %p396 = scmp.lt.s32.totalorder %s395, 0
        %s397 = scalar_select %p396, %s395, 0
        %s398 = smul.u32 2, %s397
        %s399 = smul.u32 2, %s35
        %s400 = smul.u32 %s35, 16
        %v401 = vld [vmem:[%s326 + $0xf] sm:$0x1]
        %v402 = vld [vmem:[%s344] sm:$0x1]
        %v403 = vld [vmem:[%s335] sm:$0xff]
        %v404 = vld [vmem:[%s335 + $0x8] sm:$0xff]
        %vm407 = vcmask 1040384
        %v408 = vrot.slane %v403, 7
        %v409 = vrot.slane %v404, 7
        %v410 = vsel %vm407, %v408, %v409
        %v415 = vrot.slane %v402, 7
        %v417 = vsel %vm407, %v401, %v408
        %v418 = vsel %vm407, %v409, %v415
        %s419 = ssub.s32 %s400, 1
        %v420 = vlaneseq
        %v421 = vshrl.u32 %v420, 7
        %v422 = vadd.s32 %v421, 8
        %v423 = vadd.s32 %v421, 16
        %v424 = vstv %s419
        %v425 = vadd.s32 %v424, %v421
        %v426 = vadd.s32 %v424, %v422
        %v427 = vadd.s32 %v424, %v423
        %vm428 = vcmp.ge.s32.totalorder %v425, 0
        %vm429 = vcmp.ge.s32.totalorder %v426, 0
        %vm430 = vcmp.ge.s32.totalorder %v427, 0
        %vm431 = vcmp.lt.s32.totalorder %v425, 16
        %vm432 = vcmp.lt.s32.totalorder %v426, 16
        %vm433 = vcmp.lt.s32.totalorder %v427, 16
        %vm434 = vmand %vm428, %vm431
        %vm435 = vmand %vm429, %vm432
        %vm436 = vmand %vm430, %vm433
        %v437 = vsel %vm434, 1, 0
        %v438 = vsel %vm435, 1, 0
        %v439 = vsel %vm436, 1, 0
        %vm440 = vcmp.eq.s32.totalorder %v437, 1
        %vm441 = vcmp.eq.s32.totalorder %v438, 1
        %vm442 = vcmp.eq.s32.totalorder %v439, 1
        %v443 = vsel %vm440, %v417, 0.0
        %v444 = vsel %vm441, %v410, 0.0
        %v445 = vsel %vm442, %v418, 0.0
        %v446 = vld [vmem:[#allocation8] sm:$0xff]
        %v447 = vld [vmem:[#allocation8 + $0x8] sm:$0xff]
        %v448 = vld [vmem:[#allocation8 + $0x10] sm:$0xff]
        %v449 = vld [vmem:[#allocation8 + $0x18] sm:$0xff]
        %v450 = vld [vmem:[#allocation8 + $0x20] sm:$0xff]
        %v451 = vld [vmem:[#allocation8 + $0x28] sm:$0xff]
        %v452 = vld [vmem:[#allocation8 + $0x30] sm:$0xff]
        %v453 = vld [vmem:[#allocation8 + $0x38] sm:$0xff]
        %v454 = vld [vmem:[#allocation8 + $0x40] sm:$0xff]
        %v455 = vld [vmem:[#allocation8 + $0x48] sm:$0xff]
        %v456 = vld [vmem:[#allocation8 + $0x50] sm:$0xff]
        %v457 = vld [vmem:[#allocation8 + $0x58] sm:$0xff]
        %v458 = vld [vmem:[#allocation8 + $0x60] sm:$0xff]
        %v459 = vld [vmem:[#allocation8 + $0x68] sm:$0xff]
        %v460 = vld [vmem:[#allocation8 + $0x70] sm:$0xff]
        %v461 = vld [vmem:[#allocation8 + $0x78] sm:$0xff]
        %s462 = scalar_lea.vmem [#allocation8], 128
        %v463 = vld [vmem:[%s462] sm:$0xff]
        %v464 = vld [vmem:[%s462 + $0x8] sm:$0xff]
        %v465 = vld [vmem:[%s462 + $0x10] sm:$0xff]
        %v466 = vld [vmem:[%s462 + $0x18] sm:$0xff]
        %v467 = vld [vmem:[%s462 + $0x20] sm:$0xff]
        %v468 = vld [vmem:[%s462 + $0x28] sm:$0xff]
        %v469 = vld [vmem:[%s462 + $0x30] sm:$0xff]
        %v470 = vld [vmem:[%s462 + $0x38] sm:$0xff]
        %v471 = vld [vmem:[%s462 + $0x40] sm:$0xff]
        %v472 = vld [vmem:[%s462 + $0x48] sm:$0xff]
        %v473 = vld [vmem:[%s462 + $0x50] sm:$0xff]
        %v474 = vld [vmem:[%s462 + $0x58] sm:$0xff]
        %v475 = vld [vmem:[%s462 + $0x60] sm:$0xff]
        %v476 = vld [vmem:[%s462 + $0x68] sm:$0xff]
        %v477 = vld [vmem:[%s462 + $0x70] sm:$0xff]
        %v478 = vld [vmem:[%s462 + $0x78] sm:$0xff]
        %vm482 = vcmask 1046528
        %v483 = vrot.slane %v443, 1
        %v484 = vrot.slane %v444, 1
        %v485 = vsel %vm482, %v483, %v484
        %v486 = vrot.slane %v445, 1
        %v487 = vsel %vm482, %v484, %v486
        %490 = vmatprep.subr.mxu0 0.0
        %491 = vmatpush1.msra.mxu0 %v463
        %492 = vmatprep.subr.mxu0 0.0
        %493 = vmatpush1.msra.mxu0 %v464
        %494 = vmatprep.subr.mxu0 0.0
        %495 = vmatpush1.msra.mxu0 %v465
        %496 = vmatprep.subr.mxu0 0.0
        %497 = vmatpush1.msra.mxu0 %v466
        %498 = vmatprep.subr.mxu0 0.0
        %499 = vmatpush1.msra.mxu0 %v467
        %500 = vmatprep.subr.mxu0 0.0
        %501 = vmatpush1.msra.mxu0 %v468
        %502 = vmatprep.subr.mxu0 0.0
        %503 = vmatpush1.msra.mxu0 %v469
        %504 = vmatprep.subr.mxu0 0.0
        %505 = vmatpush1.msra.mxu0 %v470
        %506 = vmatprep.subr.mxu0 0.0
        %507 = vmatpush1.msra.mxu0 %v471
        %508 = vmatprep.subr.mxu0 0.0
        %509 = vmatpush1.msra.mxu0 %v472
        %510 = vmatprep.subr.mxu0 0.0
        %511 = vmatpush1.msra.mxu0 %v473
        %512 = vmatprep.subr.mxu0 0.0
        %513 = vmatpush1.msra.mxu0 %v474
        %514 = vmatprep.subr.mxu0 0.0
        %515 = vmatpush1.msra.mxu0 %v475
        %516 = vmatprep.subr.mxu0 0.0
        %517 = vmatpush1.msra.mxu0 %v476
        %518 = vmatprep.subr.mxu0 0.0
        %519 = vmatpush1.msra.mxu0 %v477
        %520 = vmatprep.subr.mxu0 0.0
        %521 = vmatpush1.msra.mxu0 %v478
        %522 = vmatprep.subr.mxu0 0.0
        %523 = vmatpush1.msra.mxu0 0.0
        %524 = vmatprep.subr.mxu0 0.0
        %525 = vmatpush1.msra.mxu0 0.0
        %526 = vmatprep.subr.mxu0 0.0
        %527 = vmatpush1.msra.mxu0 0.0
        %528 = vmatprep.subr.mxu0 0.0
        %529 = vmatpush1.msra.mxu0 0.0
        %530 = vmatprep.subr.mxu0 0.0
        %531 = vmatpush1.msra.mxu0 0.0
        %532 = vmatprep.subr.mxu0 0.0
        %533 = vmatpush1.msra.mxu0 0.0
        %534 = vmatprep.subr.mxu0 0.0
        %535 = vmatpush1.msra.mxu0 0.0
        %536 = vmatprep.subr.mxu0 0.0
        %537 = vmatpush1.msra.mxu0 0.0
        %538 = vmatprep.subr.mxu0 0.0
        %539 = vmatpush1.msra.mxu0 0.0
        %540 = vmatprep.subr.mxu0 0.0
        %541 = vmatpush1.msra.mxu0 0.0
        %542 = vmatprep.subr.mxu0 0.0
        %543 = vmatpush1.msra.mxu0 0.0
        %544 = vmatprep.subr.mxu0 0.0
        %545 = vmatpush1.msra.mxu0 0.0
        %546 = vmatprep.subr.mxu0 0.0
        %547 = vmatpush1.msra.mxu0 0.0
        %548 = vmatprep.subr.mxu0 0.0
        %549 = vmatpush1.msra.mxu0 0.0
        %550 = vmatprep.subr.mxu0 0.0
        %551 = vmatpush1.msra.mxu0 0.0
        %552 = vmatprep.subr.mxu0 0.0
        %553 = vmatpush1.msra.mxu0 0.0
        %554 = vmatprep.mubr.f32.mxu0 0.0
        %555 = vmatmul.mubr.f32.gmra.mrb[0].mxu0 %v485
        %v556 = vpop.f32.mrb[0].mxu0
        %v557 = vadd.f32 0.0, %v556
        %v558 = vpop.f32.mrb[0].mxu0
        %559 = vmatprep.mubr.f32.mxu0 0.0
        %560 = vmatmul.mubr.f32.gmra.mrb[0].mxu0 %v487
        %v561 = vpop.f32.mrb[0].mxu0
        %v562 = vadd.f32 0.0, %v561
        %v563 = vpop.f32.mrb[0].mxu0
        %564 = vdwg.mxu0
        %565 = vmatprep.subr.mxu0 0.0
        %566 = vmatpush1.msra.mxu0 %v446
        %567 = vmatprep.subr.mxu0 0.0
        %568 = vmatpush1.msra.mxu0 %v447
        %569 = vmatprep.subr.mxu0 0.0
        %570 = vmatpush1.msra.mxu0 %v448
        %571 = vmatprep.subr.mxu0 0.0
        %572 = vmatpush1.msra.mxu0 %v449
        %573 = vmatprep.subr.mxu0 0.0
        %574 = vmatpush1.msra.mxu0 %v450
        %575 = vmatprep.subr.mxu0 0.0
        %576 = vmatpush1.msra.mxu0 %v451
        %577 = vmatprep.subr.mxu0 0.0
        %578 = vmatpush1.msra.mxu0 %v452
        %579 = vmatprep.subr.mxu0 0.0
        %580 = vmatpush1.msra.mxu0 %v453
        %581 = vmatprep.subr.mxu0 0.0
        %582 = vmatpush1.msra.mxu0 %v454
        %583 = vmatprep.subr.mxu0 0.0
        %584 = vmatpush1.msra.mxu0 %v455
        %585 = vmatprep.subr.mxu0 0.0
        %586 = vmatpush1.msra.mxu0 %v456
        %587 = vmatprep.subr.mxu0 0.0
        %588 = vmatpush1.msra.mxu0 %v457
        %589 = vmatprep.subr.mxu0 0.0
        %590 = vmatpush1.msra.mxu0 %v458
        %591 = vmatprep.subr.mxu0 0.0
        %592 = vmatpush1.msra.mxu0 %v459
        %593 = vmatprep.subr.mxu0 0.0
        %594 = vmatpush1.msra.mxu0 %v460
        %595 = vmatprep.subr.mxu0 0.0
        %596 = vmatpush1.msra.mxu0 %v461
        %597 = vmatprep.subr.mxu0 0.0
        %598 = vmatpush1.msra.mxu0 0.0
        %599 = vmatprep.subr.mxu0 0.0
        %600 = vmatpush1.msra.mxu0 0.0
        %601 = vmatprep.subr.mxu0 0.0
        %602 = vmatpush1.msra.mxu0 0.0
        %603 = vmatprep.subr.mxu0 0.0
        %604 = vmatpush1.msra.mxu0 0.0
        %605 = vmatprep.subr.mxu0 0.0
        %606 = vmatpush1.msra.mxu0 0.0
        %607 = vmatprep.subr.mxu0 0.0
        %608 = vmatpush1.msra.mxu0 0.0
        %609 = vmatprep.subr.mxu0 0.0
        %610 = vmatpush1.msra.mxu0 0.0
        %611 = vmatprep.subr.mxu0 0.0
        %612 = vmatpush1.msra.mxu0 0.0
        %613 = vmatprep.subr.mxu0 0.0
        %614 = vmatpush1.msra.mxu0 0.0
        %615 = vmatprep.subr.mxu0 0.0
        %616 = vmatpush1.msra.mxu0 0.0
        %617 = vmatprep.subr.mxu0 0.0
        %618 = vmatpush1.msra.mxu0 0.0
        %619 = vmatprep.subr.mxu0 0.0
        %620 = vmatpush1.msra.mxu0 0.0
        %621 = vmatprep.subr.mxu0 0.0
        %622 = vmatpush1.msra.mxu0 0.0
        %623 = vmatprep.subr.mxu0 0.0
        %624 = vmatpush1.msra.mxu0 0.0
        %625 = vmatprep.subr.mxu0 0.0
        %626 = vmatpush1.msra.mxu0 0.0
        %627 = vmatprep.subr.mxu0 0.0
        %628 = vmatpush1.msra.mxu0 0.0
        %629 = vmatprep.mubr.f32.mxu0 0.0
        %630 = vmatmul.mubr.f32.gmra.mrb[0].mxu0 %v443
        %v631 = vpop.f32.mrb[0].mxu0
        %v632 = vadd.f32 %v557, %v631
        %v633 = vpop.f32.mrb[0].mxu0
        %634 = vmatprep.mubr.f32.mxu0 0.0
        %635 = vmatmul.mubr.f32.gmra.mrb[0].mxu0 %v444
        %v636 = vpop.f32.mrb[0].mxu0
        %v637 = vadd.f32 %v562, %v636
        %v638 = vpop.f32.mrb[0].mxu0
        %639 = vdwg.mxu0
        %s640 = scalar_lea.vmem [#allocation8], 256
        %v641 = vld [vmem:[%s640] sm:$0xff]
        %v642 = vld [vmem:[%s640 + $0x8] sm:$0xff]
        %v643 = vld [vmem:[%s640 + $0x10] sm:$0xff]
        %v644 = vld [vmem:[%s640 + $0x18] sm:$0xff]
        %v645 = vld [vmem:[%s640 + $0x20] sm:$0xff]
        %v646 = vld [vmem:[%s640 + $0x28] sm:$0xff]
        %v647 = vld [vmem:[%s640 + $0x30] sm:$0xff]
        %v648 = vld [vmem:[%s640 + $0x38] sm:$0xff]
        %v649 = vld [vmem:[%s640 + $0x40] sm:$0xff]
        %v650 = vld [vmem:[%s640 + $0x48] sm:$0xff]
        %v651 = vld [vmem:[%s640 + $0x50] sm:$0xff]
        %v652 = vld [vmem:[%s640 + $0x58] sm:$0xff]
        %v653 = vld [vmem:[%s640 + $0x60] sm:$0xff]
        %v654 = vld [vmem:[%s640 + $0x68] sm:$0xff]
        %v655 = vld [vmem:[%s640 + $0x70] sm:$0xff]
        %v656 = vld [vmem:[%s640 + $0x78] sm:$0xff]
        %vm657 = vcmask 1045504
        %v658 = vrot.slane %v443, 2
        %v659 = vrot.slane %v444, 2
        %v660 = vsel %vm657, %v658, %v659
        %v661 = vrot.slane %v445, 2
        %v662 = vsel %vm657, %v659, %v661
        %665 = vmatprep.subr.mxu0 0.0
        %666 = vmatpush1.msra.mxu0 %v641
        %667 = vmatprep.subr.mxu0 0.0
        %668 = vmatpush1.msra.mxu0 %v642
        %669 = vmatprep.subr.mxu0 0.0
        %670 = vmatpush1.msra.mxu0 %v643
        %671 = vmatprep.subr.mxu0 0.0
        %672 = vmatpush1.msra.mxu0 %v644
        %673 = vmatprep.subr.mxu0 0.0
        %674 = vmatpush1.msra.mxu0 %v645
        %675 = vmatprep.subr.mxu0 0.0
        %676 = vmatpush1.msra.mxu0 %v646
        %677 = vmatprep.subr.mxu0 0.0
        %678 = vmatpush1.msra.mxu0 %v647
        %679 = vmatprep.subr.mxu0 0.0
        %680 = vmatpush1.msra.mxu0 %v648
        %681 = vmatprep.subr.mxu0 0.0
        %682 = vmatpush1.msra.mxu0 %v649
        %683 = vmatprep.subr.mxu0 0.0
        %684 = vmatpush1.msra.mxu0 %v650
        %685 = vmatprep.subr.mxu0 0.0
        %686 = vmatpush1.msra.mxu0 %v651
        %687 = vmatprep.subr.mxu0 0.0
        %688 = vmatpush1.msra.mxu0 %v652
        %689 = vmatprep.subr.mxu0 0.0
        %690 = vmatpush1.msra.mxu0 %v653
        %691 = vmatprep.subr.mxu0 0.0
        %692 = vmatpush1.msra.mxu0 %v654
        %693 = vmatprep.subr.mxu0 0.0
        %694 = vmatpush1.msra.mxu0 %v655
        %695 = vmatprep.subr.mxu0 0.0
        %696 = vmatpush1.msra.mxu0 %v656
        %697 = vmatprep.subr.mxu0 0.0
        %698 = vmatpush1.msra.mxu0 0.0
        %699 = vmatprep.subr.mxu0 0.0
        %700 = vmatpush1.msra.mxu0 0.0
        %701 = vmatprep.subr.mxu0 0.0
        %702 = vmatpush1.msra.mxu0 0.0
        %703 = vmatprep.subr.mxu0 0.0
        %704 = vmatpush1.msra.mxu0 0.0
        %705 = vmatprep.subr.mxu0 0.0
        %706 = vmatpush1.msra.mxu0 0.0
        %707 = vmatprep.subr.mxu0 0.0
        %708 = vmatpush1.msra.mxu0 0.0
        %709 = vmatprep.subr.mxu0 0.0
        %710 = vmatpush1.msra.mxu0 0.0
        %711 = vmatprep.subr.mxu0 0.0
        %712 = vmatpush1.msra.mxu0 0.0
        %713 = vmatprep.subr.mxu0 0.0
        %714 = vmatpush1.msra.mxu0 0.0
        %715 = vmatprep.subr.mxu0 0.0
        %716 = vmatpush1.msra.mxu0 0.0
        %717 = vmatprep.subr.mxu0 0.0
        %718 = vmatpush1.msra.mxu0 0.0
        %719 = vmatprep.subr.mxu0 0.0
        %720 = vmatpush1.msra.mxu0 0.0
        %721 = vmatprep.subr.mxu0 0.0
        %722 = vmatpush1.msra.mxu0 0.0
        %723 = vmatprep.subr.mxu0 0.0
        %724 = vmatpush1.msra.mxu0 0.0
        %725 = vmatprep.subr.mxu0 0.0
        %726 = vmatpush1.msra.mxu0 0.0
        %727 = vmatprep.subr.mxu0 0.0
        %728 = vmatpush1.msra.mxu0 0.0
        %729 = vmatprep.mubr.f32.mxu0 0.0
        %730 = vmatmul.mubr.f32.gmra.mrb[0].mxu0 %v660
        %v731 = vpop.f32.mrb[0].mxu0
        %v732 = vadd.f32 0.0, %v731
        %v733 = vpop.f32.mrb[0].mxu0
        %734 = vmatprep.mubr.f32.mxu0 0.0
        %735 = vmatmul.mubr.f32.gmra.mrb[0].mxu0 %v662
        %v736 = vpop.f32.mrb[0].mxu0
        %v737 = vadd.f32 0.0, %v736
        %v738 = vpop.f32.mrb[0].mxu0
        %739 = vdwg.mxu0
        %v740 = vadd.f32 %v632, %v732
        %v741 = vadd.f32 %v637, %v737
        %v742 = vstv %s400
        %v743 = vadd.s32 %v742, %v421
        %v744 = vadd.s32 %v742, %v422
        %vm745 = vcmp.lt.s32.totalorder %v743, 16
        %vm746 = vcmp.lt.s32.totalorder %v744, 16
        %v747 = vsel %vm745, 1, 0
        %v748 = vsel %vm746, 1, 0
        %vm749 = vcmp.eq.s32.totalorder %v747, 1
        %vm750 = vcmp.eq.s32.totalorder %v748, 1
        %v751 = vsel %vm749, %v740, 0.0
        %v752 = vsel %vm750, %v741, 0.0
        %753 = vst [vmem:[%s382] sm:$0xff] %v751
        %754 = vst [vmem:[%s382 + $0x8] sm:$0xff] %v752
        %p755 = scmp.eq.s32.totalorder %s35, 0
        // Predicated region
        $region53: #{tpu_custom_call.1} parent=35 // pred_check
          %p756 = pneg %p755
        $region54: #{tpu_custom_call.1} parent=35 // pred_check_branch
          %758 = sbr.rel (%p756) target = $region56
        $region55: #{tpu_custom_call.1} parent=35 // pred_region
          %759 = vst [vmem:[%s389] sm:$0xff] 0.0
          %760 = vst [vmem:[%s389 + $0x8] sm:$0xff] 0.0
        $region56: #{tpu_custom_call.1} parent=35 // pred_fallthru
          _
        %v761 = vld [vmem:[%s389] sm:$0xff]
        %v762 = vadd.f32 %v751, %v752
        %v763 = vadd.f32 %v761, %v762
        %764 = vst [vmem:[%s389] sm:$0xff] %v763
        %s765 = scalar_lea.vmem %s389, 8 [#allocation11]
        %v766 = vld [vmem:[%s765] sm:$0xff]
        %v767 = vmul.f32 %v751, %v751
        %v768 = vmul.f32 %v752, %v752
        %v769 = vadd.f32 %v767, %v768
        %v770 = vadd.f32 %v766, %v769
        %771 = vst [vmem:[%s765] sm:$0xff] %v770
        %s772 = sand.u32 %s169, 1
        %s773 = scalar_lea.sflag [#allocation4], %s772
        %s774 = sand.u32 %s169, 1
        %s775 = smul.addr %s774, 16
        %s776 = scalar_lea.vmem [#allocation10], %s775
        %s777 = sand.u32 %s195, 1
        %s778 = scalar_lea.sflag [#allocation12], %s777
        %s779 = sand.u32 %s195, 1
        %s780 = smul.addr %s779, 16
        %s781 = scalar_lea.vmem [#allocation11], %s780
        // Predicated region
        $region57: #{tpu_custom_call.1} parent=35 // pred_check
          %p782 = pneg %p179
        $region58: #{tpu_custom_call.1} parent=35 // pred_check_branch
          %784 = sbr.rel (%p782) target = $region60
        $region59: #{tpu_custom_call.1} parent=35 // pred_region
          %s785 = smul.u32 2, %s35
          %s787 = ssub.s32 256, 256
          %788 = vsyncadd %s773, %s787
          %s789 = smul.addr %s34, 2
          %s790 = sadd.s32 %s785, %s789
          %s791 = smul.addr %s790, 128
          %s792 = scalar_lea.hbm %s4, %s791
          %s793 = sshll.u32 %s776, 4
          %s794 = int_to_ptr.vmem [resolvable:$true] %s793
          %799 = dma.vmem_to_hbm [thread:$0]  %s794, 256, %s792, %s773, 128, 128, 8
        $region60: #{tpu_custom_call.1} parent=35 // pred_fallthru
          _
        // Predicated region
        $region61: #{tpu_custom_call.1} parent=35 // pred_check
          %p800 = pneg %p205
        $region62: #{tpu_custom_call.1} parent=35 // pred_check_branch
          %802 = sbr.rel (%p800) target = $region64
        $region63: #{tpu_custom_call.1} parent=35 // pred_region
          %s804 = ssub.s32 256, 256
          %805 = vsyncadd %s778, %s804
          %s806 = smul.addr %s34, 2
          %s807 = smul.addr %s806, 128
          %s808 = scalar_lea.hbm %s5, %s807
          %s809 = sshll.u32 %s781, 4
          %s810 = int_to_ptr.vmem [resolvable:$true] %s809
          %815 = dma.vmem_to_hbm [thread:$0]  %s810, 256, %s808, %s778, 128, 128, 8
        $region64: #{tpu_custom_call.1} parent=35 // pred_fallthru
          _
      $region36: #{tpu_custom_call.1} parent=5 // pred_fallthru
        _
      %p816 = scmp.le.s32.totalorder 2, %s25
      // Predicated region
      $region65: #{tpu_custom_call.1} parent=5 // pred_check
        %p817 = pneg %p816
      $region66: #{tpu_custom_call.1} parent=5 // pred_check_branch
        %819 = sbr.rel (%p817) target = $region68
      $region67: #{tpu_custom_call.1} parent=5 // pred_region
        %s820 = ssub.s32 %s25, 2
        // Predicated region
        $region69: #{tpu_custom_call.1} parent=67 // pred_check
          %p821 = pneg %p185
        $region70: #{tpu_custom_call.1} parent=67 // pred_check_branch
          %823 = sbr.rel (%p821) target = $region72
        $region71: #{tpu_custom_call.1} parent=67 // pred_region
          %s824 = sand.u32 %s170, 1
          %s825 = scalar_lea.sflag [#allocation4], %s824
          %s826 = sand.u32 %s170, 1
          %s827 = smul.addr %s826, 16
          %s828 = scalar_lea.vmem [#allocation10], %s827
          %829 = dma.done %s825, 256
        $region72: #{tpu_custom_call.1} parent=67 // pred_fallthru
          _
        // Predicated region
        $region73: #{tpu_custom_call.1} parent=67 // pred_check
          %p830 = pneg %p211
        $region74: #{tpu_custom_call.1} parent=67 // pred_check_branch
          %832 = sbr.rel (%p830) target = $region76
        $region75: #{tpu_custom_call.1} parent=67 // pred_region
          %s833 = sand.u32 %s196, 1
          %s834 = scalar_lea.sflag [#allocation12], %s833
          %s835 = sand.u32 %s196, 1
          %s836 = smul.addr %s835, 16
          %s837 = scalar_lea.vmem [#allocation11], %s836
          %838 = dma.done %s834, 256
        $region76: #{tpu_custom_call.1} parent=67 // pred_fallthru
          _
      $region68: #{tpu_custom_call.1} parent=5 // pred_fallthru
        _
    $region6: #{tpu_custom_call.1} parent=1 // loop_footer
      %s29 = sadd.s32 1, %s25
    $region7: #{tpu_custom_call.1} parent=1 // loop_footer_branch
      %24 = sbr.rel target = $region3
    $region8: #{tpu_custom_call.1} parent=1 // loop_exit
      _
    %839 = vsyncpa [#allocation3], 1
    %s840 = scalar_lea.sflag [#allocation3], 1
    %841 = vsyncpa %s840, 1
    %842 = vsyncpa [#allocation6], 1
    %s843 = scalar_lea.sflag [#allocation6], 1
    %844 = vsyncpa %s843, 1
    %845 = vsyncpa [#allocation9], 1
    %846 = vsyncpa [#allocation4], 1
    %s847 = scalar_lea.sflag [#allocation4], 1
    %848 = vsyncpa %s847, 1
    %849 = vsyncpa [#allocation12], 1
    %s850 = scalar_lea.sflag [#allocation12], 1
    %851 = vsyncpa %s850, 1

</llo_original>
